<compile_context>
chip_gen: v6e
topology: v6e:2x2x1
jax: 0.10.0
libtpu: 0.0.40
codegen_flags: <defaults>
</compile_context>

<pallas_src>
import math

import jax
import jax.numpy as jnp
import numpy as np
from jax.experimental import pallas as pl
from jax.experimental.pallas import tpu as pltpu

STRIDE = 4   # fixed stride of SincConv.forward (F.conv1d(..., stride=4))
HALO = 128   # one lane-block halo covering the filter taps that spill past the tile


def build_sinc_filters(filt_b1, filt_band, N_filt, Filt_dim, fs):
    """Faithful port of SincConv.forward's filter construction (plain JAX, tiny)."""
    N = Filt_dim
    freq_scale = fs * 1.0
    min_freq = 50.0
    min_band = 50.0
    t_right = jnp.linspace(1.0, (N - 1) / 2, int((N - 1) / 2), dtype=jnp.float32) / fs
    filt_beg = jnp.abs(filt_b1) + min_freq / freq_scale
    filt_end = filt_beg + (jnp.abs(filt_band) + min_band / freq_scale)
    n = jnp.linspace(0.0, float(N), N, dtype=jnp.float32)
    window = (0.54 - 0.46 * jnp.cos(2.0 * math.pi * n / N)).astype(jnp.float32)

    def sinc_bank(band_hz):  # band_hz: (N_filt,)
        arg = 2.0 * math.pi * band_hz[:, None] * t_right[None, :]
        y_right = jnp.sin(arg) / arg
        y_left = y_right[:, ::-1]
        ones = jnp.ones((band_hz.shape[0], 1), jnp.float32)
        return jnp.concatenate([y_left, ones, y_right], axis=1)  # (N_filt, N) for odd N

    low_pass1 = 2.0 * filt_beg[:, None] * sinc_bank(filt_beg * freq_scale)
    low_pass2 = 2.0 * filt_end[:, None] * sinc_bank(filt_end * freq_scale)
    band_pass = low_pass2 - low_pass1
    band_pass = band_pass / jnp.max(band_pass, axis=1, keepdims=True)
    return (band_pass * window[None, :]).astype(jnp.float32)


def _sinc_conv_kernel(xa_ref, xh_ref, w_ref, out_ref, rhs_ref):
    """One (L_out-tile, batch) grid step.

    xa_ref:  (1, STRIDE, TL)    phase-decomposed input tile i           (stream_dtype)
    xh_ref:  (1, STRIDE, HALO)  one 128-lane halo block after tile i    (stream_dtype)
    w_ref:   (NF_pad, K_pad)    filter taps, w_ref[f, 4*j + r] = W[f,k] (stream_dtype)
    out_ref: (1, NF_pad, TL)    lane-dense NCL output tile              (f32)
    rhs_ref: (K_pad, TL)        VMEM scratch for the fused-matmul RHS   (stream_dtype)
    """
    s = xa_ref.shape[1]          # STRIDE
    tl = xa_ref.shape[2]
    k_pad = w_ref.shape[1]
    j_taps = k_pad // s          # ceil(Filt_dim / STRIDE), static

    # rhs[4*j + r, m] = x_ph[r, m + j]  (shifted lane-slices, no intermediate staging buf).
    xcat = jnp.concatenate([xa_ref[0], xh_ref[0]], axis=-1)   # (STRIDE, TL + HALO) value
    for j in range(j_taps):      # static unroll
        rhs_ref[s * j:s * (j + 1), :] = xcat[:, j:j + tl]

    # Single fused MXU matmul (bf16-native when stream_dtype=bf16), f32 accumulate.
    out = jnp.dot(w_ref[...], rhs_ref[...], preferred_element_type=jnp.float32)
    out_ref[0] = out.astype(out_ref.dtype)


def sinc_conv(x, filt_b1, filt_band, *, N_filt, Filt_dim, fs, padding="VALID",
              tile_l=2048, stream_dtype=jnp.float32):
    """Forward of SincConv. x: (B, 1, L) f32. Returns (B, N_filt, L_out) f32."""
    B, C, L = x.shape
    assert C == 1, "SincConv convolves a single input channel"
    assert Filt_dim % 2 == 1, "SincConv requires an odd Filt_dim"
    assert tile_l % 128 == 0

    filters = build_sinc_filters(filt_b1, filt_band, N_filt, Filt_dim, fs)  # (N_filt, K)

    K = Filt_dim
    if padding == "SAME":
        x_p = jnp.pad(x, ((0, 0), (0, 0), (K // 2, K // 2)), mode="reflect")
    else:
        x_p = x
    L_p = x_p.shape[-1]
    L_out = (L_p - K) // STRIDE + 1
    assert L_out >= 1

    J = -(-K // STRIDE)                       # taps per stride phase (ceil)
    assert J - 1 <= HALO, "Filt_dim too large for a single 128-lane halo block"
    K_pad = STRIDE * J
    NF_pad = -(-N_filt // 8) * 8              # sublane-aligned filter count

    # Clamp the tile so tiny inputs don't DMA mostly-padding; keep a multiple of 128.
    tile_l = max(128, min(tile_l, -(-L_out // 128) * 128))
    num_tiles = -(-L_out // tile_l)
    M_pad = num_tiles * tile_l + HALO         # last-tile slack + one halo block

    # Phase decomposition (cheap layout glue): x_ph[b, r, m] = x_pad[b, 0, STRIDE*m + r].
    x_flat = x_p[:, 0, :]
    pad_amt = STRIDE * M_pad - L_p
    assert pad_amt >= 0
    x_flat = jnp.pad(x_flat, ((0, 0), (0, pad_amt)))
    x_ph = x_flat.reshape(B, M_pad, STRIDE).transpose(0, 2, 1).astype(stream_dtype)

    # Filter taps padded to (NF_pad, STRIDE*J); zero taps contribute nothing.
    w2 = jnp.zeros((NF_pad, K_pad), jnp.float32).at[:N_filt, :K].set(filters)
    w2 = w2.astype(stream_dtype)

    # Per-step VMEM footprint -> vmem_limit (v7x has only 64 MiB physical; stay <= 32 MiB).
    dt_bytes = jnp.dtype(stream_dtype).itemsize
    per_step_bytes = (
        2 * STRIDE * tile_l * dt_bytes        # input tile (double-buffered)
        + 2 * STRIDE * HALO * dt_bytes        # halo block (double-buffered)
        + 2 * NF_pad * K_pad * dt_bytes       # constant filter block
        + 2 * NF_pad * tile_l * 4             # f32 output tile (double-buffered)
        + K_pad * tile_l * dt_bytes           # fused-RHS VMEM scratch
    )
    vmem_limit = int(min(max(2 * per_step_bytes + (8 << 20), 16 << 20), 32 << 20))

    out = pl.pallas_call(
        _sinc_conv_kernel,
        out_shape=jax.ShapeDtypeStruct((B, NF_pad, L_out), jnp.float32),
        grid_spec=pltpu.PrefetchScalarGridSpec(
            num_scalar_prefetch=0,
            grid=(num_tiles, B),   # long axis first so megacore shards the tile axis
            in_specs=[
                pl.BlockSpec((1, STRIDE, tile_l), lambda i, b: (b, 0, i)),
                pl.BlockSpec((1, STRIDE, HALO),
                             lambda i, b: (b, 0, (i + 1) * (tile_l // HALO))),
                pl.BlockSpec((NF_pad, K_pad), lambda i, b: (0, 0)),
            ],
            out_specs=pl.BlockSpec((1, NF_pad, tile_l), lambda i, b: (b, 0, i)),
            scratch_shapes=[pltpu.VMEM((K_pad, tile_l), stream_dtype)],
        ),
        compiler_params=pltpu.CompilerParams(
            dimension_semantics=("parallel", "parallel"),
            vmem_limit_bytes=vmem_limit,
        ),
    )(x_ph, x_ph, w2)

    if NF_pad != N_filt:   # never hit when N_filt is already a multiple of 8
        out = out[:, :N_filt, :]
    return out


if __name__ == "__main__":
    # Small shapes consistent with the module: batch=2, 1 input channel (raw audio),
    # L=512 samples, N_filt=8 sinc filters of length Filt_dim=17, fs=16 kHz.
    B, C, L = 2, 1, 512
    N_filt, Filt_dim, fs = 8, 17, 16000

    # Parameter init exactly as SincConv.__init__ (mel-spaced cutoffs).
    low_freq_mel = 80
    high_freq_mel = 2595 * np.log10(1 + fs / 2 / 700)
    mel_points = np.linspace(low_freq_mel, high_freq_mel, N_filt)
    f_cos = 700 * (10 ** (mel_points / 2595) - 1)
    b1 = np.roll(f_cos, 1)
    b2 = np.roll(f_cos, -1)
    b1[0] = 30
    b2[-1] = fs / 2 - 100
    freq_scale = fs * 1.0
    filt_b1 = jnp.asarray(b1 / freq_scale, dtype=jnp.float32)
    filt_band = jnp.asarray((b2 - b1) / freq_scale, dtype=jnp.float32)

    x = jax.random.normal(jax.random.PRNGKey(0), (B, C, L), dtype=jnp.float32)

    filters = build_sinc_filters(filt_b1, filt_band, N_filt, Filt_dim, fs)
    w_oih = filters.reshape(N_filt, 1, Filt_dim)

    # --- config 1: padding='SAME', f32 streamed operands (default tile_l, auto-clamped) ---
    out_same = sinc_conv(x, filt_b1, filt_band, N_filt=N_filt, Filt_dim=Filt_dim,
                         fs=fs, padding="SAME")
    out_same = jax.block_until_ready(out_same)
    x_same = jnp.pad(x, ((0, 0), (0, 0), (Filt_dim // 2, Filt_dim // 2)), mode="reflect")
    ref_same = jax.lax.conv_general_dilated(
        x_same, w_oih, window_strides=(STRIDE,), padding="VALID",
        dimension_numbers=("NCH", "OIH", "NCH"),
        precision=jax.lax.Precision.HIGHEST)
    assert out_same.shape == ref_same.shape, (out_same.shape, ref_same.shape)
    assert jnp.allclose(out_same, ref_same, atol=1e-4, rtol=1e-3), \
        float(jnp.max(jnp.abs(out_same - ref_same)))

    # --- config 2: padding='VALID' (module default), bf16-streamed operands ---
    out_valid = sinc_conv(x, filt_b1, filt_band, N_filt=N_filt, Filt_dim=Filt_dim,
                          fs=fs, padding="VALID", stream_dtype=jnp.bfloat16)
    out_valid = jax.block_until_ready(out_valid)
    x_q = x.astype(jnp.bfloat16).astype(jnp.float32)
    w_q = w_oih.astype(jnp.bfloat16).astype(jnp.float32)
    ref_valid = jax.lax.conv_general_dilated(
        x_q, w_q, window_strides=(STRIDE,), padding="VALID",
        dimension_numbers=("NCH", "OIH", "NCH"),
        precision=jax.lax.Precision.HIGHEST)
    assert out_valid.shape == ref_valid.shape, (out_valid.shape, ref_valid.shape)
    assert jnp.allclose(out_valid, ref_valid, atol=2e-3, rtol=2e-3), \
        float(jnp.max(jnp.abs(out_valid - ref_valid)))

    print("KERNEL_OK")
</pallas_src>

<mosaic_0001>
module attributes {stable_mosaic.version = 11 : i64} {
  func.func @_sinc_conv_kernel(%arg0: i32, %arg1: i32, %arg2: memref<1x4x128xf32, #tpu.memory_space<vmem>>, %arg3: memref<1x4x128xf32, #tpu.memory_space<vmem>>, %arg4: memref<8x20xf32, #tpu.memory_space<vmem>>, %arg5: memref<1x8x128xf32, #tpu.memory_space<vmem>>, %arg6: memref<20x128xf32, #tpu.memory_space<vmem>>) attributes {dimension_semantics = [#tpu.dimension_semantics<parallel>, #tpu.dimension_semantics<parallel>], iteration_bounds = array<i64: 1, 2>, scalar_prefetch = 0 : i64, scratch_operands = 1 : i64, tpu.core_type = #tpu.core_type<tc>, window_params = [{transform_indices = @transform_0, window_bounds = array<i64: 1, 4, 128>}, {transform_indices = @transform_1, window_bounds = array<i64: 1, 4, 128>}, {pipeline_mode = #tpu.pipeline_mode<synchronous>, transform_indices = @transform_2, window_bounds = array<i64: 8, 20>}, {transform_indices = @transform_3, window_bounds = array<i64: 1, 8, 128>}]} {
    %c0 = arith.constant 0 : index
    %c0_0 = arith.constant 0 : index
    %c0_1 = arith.constant 0 : index
    %0 = vector.load %arg2[%c0, %c0_0, %c0_1] : memref<1x4x128xf32, #tpu.memory_space<vmem>>, vector<1x4x128xf32>
    %1 = vector.shape_cast %0 : vector<1x4x128xf32> to vector<4x128xf32>
    %c0_2 = arith.constant 0 : index
    %c0_3 = arith.constant 0 : index
    %c0_4 = arith.constant 0 : index
    %2 = vector.load %arg3[%c0_2, %c0_3, %c0_4] : memref<1x4x128xf32, #tpu.memory_space<vmem>>, vector<1x4x128xf32>
    %3 = vector.shape_cast %2 : vector<1x4x128xf32> to vector<4x128xf32>
    %4 = tpu.concatenate %1, %3 in 1 : vector<4x128xf32>, vector<4x128xf32> -> vector<4x256xf32>
    %5 = vector.extract_strided_slice %4 {offsets = [0, 0], sizes = [4, 128], strides = [1, 1]} : vector<4x256xf32> to vector<4x128xf32>
    %c0_5 = arith.constant 0 : index
    %c0_6 = arith.constant 0 : index
    %6 = vector.load %arg6[%c0_5, %c0_6] : memref<20x128xf32, #tpu.memory_space<vmem>>, vector<4x128xf32>
    tpu.vector_store %arg6[%c0_5, %c0_6], %5 {strides = array<i32>} : memref<20x128xf32, #tpu.memory_space<vmem>>, vector<4x128xf32>,
    %7 = vector.extract_strided_slice %4 {offsets = [0, 1], sizes = [4, 128], strides = [1, 1]} : vector<4x256xf32> to vector<4x128xf32>
    %c4 = arith.constant 4 : index
    %c0_7 = arith.constant 0 : index
    %8 = vector.load %arg6[%c4, %c0_7] : memref<20x128xf32, #tpu.memory_space<vmem>>, vector<4x128xf32>
    tpu.vector_store %arg6[%c4, %c0_7], %7 {strides = array<i32>} : memref<20x128xf32, #tpu.memory_space<vmem>>, vector<4x128xf32>,
    %9 = vector.extract_strided_slice %4 {offsets = [0, 2], sizes = [4, 128], strides = [1, 1]} : vector<4x256xf32> to vector<4x128xf32>
    %c8 = arith.constant 8 : index
    %c0_8 = arith.constant 0 : index
    %10 = vector.load %arg6[%c8, %c0_8] : memref<20x128xf32, #tpu.memory_space<vmem>>, vector<4x128xf32>
    tpu.vector_store %arg6[%c8, %c0_8], %9 {strides = array<i32>} : memref<20x128xf32, #tpu.memory_space<vmem>>, vector<4x128xf32>,
    %11 = vector.extract_strided_slice %4 {offsets = [0, 3], sizes = [4, 128], strides = [1, 1]} : vector<4x256xf32> to vector<4x128xf32>
    %c12 = arith.constant 12 : index
    %c0_9 = arith.constant 0 : index
    %12 = vector.load %arg6[%c12, %c0_9] : memref<20x128xf32, #tpu.memory_space<vmem>>, vector<4x128xf32>
    tpu.vector_store %arg6[%c12, %c0_9], %11 {strides = array<i32>} : memref<20x128xf32, #tpu.memory_space<vmem>>, vector<4x128xf32>,
    %13 = vector.extract_strided_slice %4 {offsets = [0, 4], sizes = [4, 128], strides = [1, 1]} : vector<4x256xf32> to vector<4x128xf32>
    %c16 = arith.constant 16 : index
    %c0_10 = arith.constant 0 : index
    %14 = vector.load %arg6[%c16, %c0_10] : memref<20x128xf32, #tpu.memory_space<vmem>>, vector<4x128xf32>
    tpu.vector_store %arg6[%c16, %c0_10], %13 {strides = array<i32>} : memref<20x128xf32, #tpu.memory_space<vmem>>, vector<4x128xf32>,
    %c0_11 = arith.constant 0 : index
    %c0_12 = arith.constant 0 : index
    %15 = vector.load %arg4[%c0_11, %c0_12] : memref<8x20xf32, #tpu.memory_space<vmem>>, vector<8x20xf32>
    %c0_13 = arith.constant 0 : index
    %c0_14 = arith.constant 0 : index
    %16 = vector.load %arg6[%c0_13, %c0_14] : memref<20x128xf32, #tpu.memory_space<vmem>>, vector<20x128xf32>
    %cst = arith.constant dense<0.000000e+00> : vector<8x128xf32>
    %17 = tpu.matmul %15, %16, %cst {dimension_numbers = #tpu.dot_dimension_numbers<[1], [0], [0], [1], [0, 0, 1, 1], [], []>} : vector<8x20xf32>, vector<20x128xf32>, vector<8x128xf32> -> vector<8x128xf32>
    %c0_15 = arith.constant 0 : index
    %c0_16 = arith.constant 0 : index
    %c0_17 = arith.constant 0 : index
    %18 = vector.load %arg5[%c0_15, %c0_16, %c0_17] : memref<1x8x128xf32, #tpu.memory_space<vmem>>, vector<1x8x128xf32>
    %19 = vector.shape_cast %18 : vector<1x8x128xf32> to vector<8x128xf32>
    %20 = vector.shape_cast %17 : vector<8x128xf32> to vector<1x8x128xf32>
    tpu.vector_store %arg5[%c0_15, %c0_16, %c0_17], %20 {strides = array<i32>} : memref<1x8x128xf32, #tpu.memory_space<vmem>>, vector<1x8x128xf32>,
    return
  }
  func.func @transform_0(%arg0: i32, %arg1: i32) -> (i32, i32, i32) {
    %c0_i32 = arith.constant 0 : i32
    %c0_i32_0 = arith.constant 0 : i32
    return %arg1, %c0_i32, %arg0 : i32, i32, i32
  }
  func.func @transform_1(%arg0: i32, %arg1: i32) -> (i32, i32, i32) {
    %c1_i32 = arith.constant 1 : i32
    %0 = arith.addi %arg0, %c1_i32 : i32
    %c1_i32_0 = arith.constant 1 : i32
    %1 = arith.muli %0, %c1_i32_0 : i32
    %c0_i32 = arith.constant 0 : i32
    %c0_i32_1 = arith.constant 0 : i32
    return %arg1, %c0_i32, %1 : i32, i32, i32
  }
  func.func @transform_2(%arg0: i32, %arg1: i32) -> (i32, i32) {
    %c0_i32 = arith.constant 0 : i32
    %c0_i32_0 = arith.constant 0 : i32
    %c0_i32_1 = arith.constant 0 : i32
    return %c0_i32, %c0_i32_0 : i32, i32
  }
  func.func @transform_3(%arg0: i32, %arg1: i32) -> (i32, i32, i32) {
    %c0_i32 = arith.constant 0 : i32
    %c0_i32_0 = arith.constant 0 : i32
    return %arg1, %c0_i32, %arg0 : i32, i32, i32
  }
}

</mosaic_0001>

<llo_original>
// kernel: tpu_custom_call.1
$region0: #{tpu_custom_call.1}
  #allocation0 [shape = 'u32[]', space=smem, size = 0x4, offset = 0x4, fixed_abs, tag = 'smem constant byte address 0x4 - core index']
  #allocation1 [shape = 'u32[144,128]{1,0:T(1,128)}', space=vmem, size = 0x12000, scoped, tag = 'internal scratch']
  #allocation2 [shape = 'f32[20,128]{1,0:T(8,128)}', space=vmem, size = 0x3000, scoped, tag = 'scratch operand']
  %s0 = inlined_call_operand.hbm [shape: f32[2,4,256], index: 0, kind: input, shape index: {}]
  %s1 = inlined_call_operand.hbm [shape: f32[2,4,256], index: 1, kind: input, shape index: {}]
  %s2 = inlined_call_operand.hbm [shape: f32[8,20], index: 2, kind: input, shape index: {}]
  %s3 = inlined_call_operand.hbm [shape: f32[2,8,128], index: 3, kind: output, shape index: {}]
  %s4 = sld [smem:[#allocation0]]
  $region57: #{tpu_custom_call.1} parent=0
    _
  %s6 = ssub.s32 1, %s4
  %s7 = scalar_select 0, %s6, %s4
  $region1: #{tpu_custom_call.1} parent=0
    #allocation3 [shape = 'u8[4096]{0}', space=vmem, size = 0x1000, scoped, tag = 'input window, operand 0']
    #allocation4 [shape = 's32[2]{0}', space=sflag, size = 0x8, scoped, tag = 'scoped memory for tpu_custom_call.1']
    #allocation5 [shape = 's32[2]{0}', space=sflag, size = 0x8, scoped, tag = 'scoped memory for tpu_custom_call.1']
    #allocation6 [shape = 'u8[4096]{0}', space=vmem, size = 0x1000, scoped, tag = 'input window, operand 1']
    #allocation7 [shape = 's32[2]{0}', space=sflag, size = 0x8, scoped, tag = 'scoped memory for tpu_custom_call.1']
    #allocation8 [shape = 'u8[4096]{0}', space=vmem, size = 0x1000, scoped, tag = 'input window, operand 2, single buffered']
    #allocation9 [shape = 'u8[8192]{0}', space=vmem, size = 0x2000, scoped, tag = 'output window, operand 0']
    %8 = vsyncpa [#allocation4], 0
    %s9 = scalar_lea.sflag [#allocation4], 1
    %10 = vsyncpa %s9, 0
    %11 = vsyncpa [#allocation7], 0
    %s12 = scalar_lea.sflag [#allocation7], 1
    %13 = vsyncpa %s12, 0
    %14 = vsyncpa [#allocation5], 0
    %s15 = scalar_lea.sflag [#allocation5], 1
    %16 = vsyncpa %s15, 0
    loop: start=0, step=1, limit=4
    $region2: #{tpu_custom_call.1} parent=1 // loop_pre_header
      _
    $region3: #{tpu_custom_call.1} parent=1 // loop_header
      %s18 = sphi 0, %s22
      %p19 = scmp.ge.s32.totalorder %s18, 4
      %s25 = sphi 0, %s37
      %s26 = sphi 0, %s33
      %s27 = sphi 0, %s25
      %s28 = sphi 0, %s26
      %s29 = sphi 0, %s27
      %s30 = sphi 0, %s28
      %s42 = sphi 0, %s44
      %s45 = sphi 0, %s42
      %s46 = sphi 0, %s45
      %s62 = sphi 0, %s46
      %s72 = sphi 0, %s74
      %s75 = sphi 0, %s72
      %s76 = sphi 0, %s75
      %s92 = sphi 0, %s76
      %s96 = sphi 0, %s96
      %s98 = sphi 0, %s96
      %s99 = sphi 0, %s98
      %s113 = sphi 0, %s99
      %s121 = sphi 0, %s123
      %s124 = sphi 0, %s121
      %s125 = sphi 0, %s124
      %s141 = sphi 0, %s125
    $region4: #{tpu_custom_call.1} parent=1 // loop_header_branch
      %21 = sbr.rel (%p19) target = $region8
    $region5: #{tpu_custom_call.1} parent=1 // loop_body
      %s23 = ssub.s32 %s18, 1
      %s24 = ssub.s32 %s18, 2
      %s31 = sadd.s32 1, %s26
      %p32 = scmp.ge.s32.totalorder %s31, 2
      %s33 = scalar_select %p32, 0, %s31
      %s34 = sadd.s32 1, %s25
      %s35 = scalar_select %p32, %s34, %s25
      %p36 = scmp.ge.s32.totalorder %s35, 1
      %s37 = scalar_select %p36, 0, %s35
      %s38 = ssub.s32 %s26, %s33
      %s39 = ssub.s32 %s25, %s37
      %s40 = sor.u32 %s38, %s39
      %p41 = scmp.eq.s32.totalorder %s40, 0
      %s43 = sadd.s32 %s42, 1
      %s44 = scalar_select %p41, %s42, %s43
      %p47 = pneg %p41
      %p48 = scmp.eq.s32.totalorder %s18, 1
      %p49 = por %p47, %p48
      %p50 = scmp.ne.s32.totalorder %s42, %s45
      %p51 = scmp.eq.s32.totalorder %s18, 0
      %p52 = por %p50, %p51
      %p53 = scmp.ne.s32.totalorder %s42, %s45
      %p54 = scmp.eq.s32.totalorder %s23, 1
      %p55 = por %p53, %p54
      %p56 = scmp.ne.s32.totalorder %s45, %s46
      %p57 = scmp.eq.s32.totalorder %s23, 0
      %p58 = por %p56, %p57
      %p59 = scmp.ne.s32.totalorder %s45, %s46
      %p60 = scmp.eq.s32.totalorder %s24, 1
      %p61 = por %p59, %p60
      %p63 = scmp.ne.s32.totalorder %s46, %s62
      %p64 = scmp.eq.s32.totalorder %s24, 0
      %p65 = por %p63, %p64
      %s66 = sadd.s32 %s25, 1
      %s67 = sadd.s32 %s37, 1
      %s68 = ssub.s32 %s26, %s33
      %s69 = ssub.s32 %s66, %s67
      %s70 = sor.u32 %s68, %s69
      %p71 = scmp.eq.s32.totalorder %s70, 0
      %s73 = sadd.s32 %s72, 1
      %s74 = scalar_select %p71, %s72, %s73
      %p77 = pneg %p71
      %p78 = scmp.eq.s32.totalorder %s18, 1
      %p79 = por %p77, %p78
      %p80 = scmp.ne.s32.totalorder %s72, %s75
      %p81 = scmp.eq.s32.totalorder %s18, 0
      %p82 = por %p80, %p81
      %p83 = scmp.ne.s32.totalorder %s72, %s75
      %p84 = scmp.eq.s32.totalorder %s23, 1
      %p85 = por %p83, %p84
      %p86 = scmp.ne.s32.totalorder %s75, %s76
      %p87 = scmp.eq.s32.totalorder %s23, 0
      %p88 = por %p86, %p87
      %p89 = scmp.ne.s32.totalorder %s75, %s76
      %p90 = scmp.eq.s32.totalorder %s24, 1
      %p91 = por %p89, %p90
      %p93 = scmp.ne.s32.totalorder %s76, %s92
      %p94 = scmp.eq.s32.totalorder %s24, 0
      %p95 = por %p93, %p94
      %s97 = sadd.s32 %s96, 1
      %p100 = scmp.eq.s32.totalorder %s18, 1
      %p101 = scmp.ne.s32.totalorder %s96, %s98
      %p102 = scmp.eq.s32.totalorder %s18, 0
      %p103 = por %p101, %p102
      %p104 = scmp.ne.s32.totalorder %s96, %s98
      %p105 = scmp.eq.s32.totalorder %s23, 1
      %p106 = por %p104, %p105
      %p107 = scmp.ne.s32.totalorder %s98, %s99
      %p108 = scmp.eq.s32.totalorder %s23, 0
      %p109 = por %p107, %p108
      %p110 = scmp.ne.s32.totalorder %s98, %s99
      %p111 = scmp.eq.s32.totalorder %s24, 1
      %p112 = por %p110, %p111
      %p114 = scmp.ne.s32.totalorder %s99, %s113
      %p115 = scmp.eq.s32.totalorder %s24, 0
      %p116 = por %p114, %p115
      %s117 = ssub.s32 %s26, %s33
      %s118 = ssub.s32 %s25, %s37
      %s119 = sor.u32 %s117, %s118
      %p120 = scmp.eq.s32.totalorder %s119, 0
      %s122 = sadd.s32 %s121, 1
      %s123 = scalar_select %p120, %s121, %s122
      %p126 = pneg %p120
      %p127 = scmp.eq.s32.totalorder %s18, 1
      %p128 = por %p126, %p127
      %p129 = scmp.ne.s32.totalorder %s121, %s124
      %p130 = scmp.eq.s32.totalorder %s18, 0
      %p131 = por %p129, %p130
      %p132 = scmp.ne.s32.totalorder %s121, %s124
      %p133 = scmp.eq.s32.totalorder %s23, 1
      %p134 = por %p132, %p133
      %p135 = scmp.ne.s32.totalorder %s124, %s125
      %p136 = scmp.eq.s32.totalorder %s23, 0
      %p137 = por %p135, %p136
      %p138 = scmp.ne.s32.totalorder %s124, %s125
      %p139 = scmp.eq.s32.totalorder %s24, 1
      %p140 = por %p138, %p139
      %p142 = scmp.ne.s32.totalorder %s125, %s141
      %p143 = scmp.eq.s32.totalorder %s24, 0
      %p144 = por %p142, %p143
      %p145 = scmp.le.s32.totalorder 1, %s18
      %p146 = scmp.lt.s32.totalorder %s18, 3
      %p147 = pnand %p145, %p146
      %p148 = pneg %p147
      // Predicated region
      $region9: #{tpu_custom_call.1} parent=5 // pred_check
        _
      $region10: #{tpu_custom_call.1} parent=5 // pred_check_branch
        %150 = sbr.rel (%p147) target = $region12
      $region11: #{tpu_custom_call.1} parent=5 // pred_region
        %s151 = ssub.s32 %s18, 1
        // Predicated region
        $region13: #{tpu_custom_call.1} parent=11 // pred_check
          %p152 = pneg %p109
        $region14: #{tpu_custom_call.1} parent=11 // pred_check_branch
          %154 = sbr.rel (%p152) target = $region16
        $region15: #{tpu_custom_call.1} parent=11 // pred_region
          %s156 = ssub.s32 128, 128
          %157 = vsyncadd [#allocation7], %s156
          %s159 = sshll.u32 [#allocation8], 4
          %s160 = int_to_ptr.vmem [resolvable:$true] %s159
          %162 = dma.hbm_to_vmem [thread:$0]  %s2, 128, %s160, [#allocation7]
        $region16: #{tpu_custom_call.1} parent=11 // pred_fallthru
          _
      $region12: #{tpu_custom_call.1} parent=5 // pred_fallthru
        _
      %p163 = scmp.lt.s32.totalorder %s18, 2
      // Predicated region
      $region17: #{tpu_custom_call.1} parent=5 // pred_check
        %p164 = pneg %p163
      $region18: #{tpu_custom_call.1} parent=5 // pred_check_branch
        %166 = sbr.rel (%p164) target = $region20
      $region19: #{tpu_custom_call.1} parent=5 // pred_region
        // Predicated region
        $region21: #{tpu_custom_call.1} parent=19 // pred_check
          %p167 = pneg %p52
        $region22: #{tpu_custom_call.1} parent=19 // pred_check_branch
          %169 = sbr.rel (%p167) target = $region24
        $region23: #{tpu_custom_call.1} parent=19 // pred_region
          %s170 = sand.u32 %s42, 1
          %s171 = scalar_lea.sflag [#allocation4], %s170
          %s172 = sand.u32 %s42, 1
          %s173 = smul.addr %s172, 4
          %s174 = scalar_lea.vmem [#allocation3], %s173
          %s176 = ssub.s32 64, 64
          %177 = vsyncadd %s171, %s176
          %s178 = smul.addr %s26, 2
          %s179 = sadd.s32 %s25, %s178
          %s180 = smul.addr %s179, 64
          %s181 = scalar_lea.hbm %s0, %s180
          %s183 = sshll.u32 %s174, 4
          %s184 = int_to_ptr.vmem [resolvable:$true] %s183
          %186 = dma.hbm_to_vmem [thread:$0]  %s181, 64, %s184, %s171
        $region24: #{tpu_custom_call.1} parent=19 // pred_fallthru
          _
        // Predicated region
        $region25: #{tpu_custom_call.1} parent=19 // pred_check
          %p187 = pneg %p82
        $region26: #{tpu_custom_call.1} parent=19 // pred_check_branch
          %189 = sbr.rel (%p187) target = $region28
        $region27: #{tpu_custom_call.1} parent=19 // pred_region
          %s190 = sand.u32 %s18, 1
          %s191 = scalar_lea.sflag [#allocation7], %s190
          %s192 = sand.u32 %s72, 1
          %s193 = smul.addr %s192, 4
          %s194 = scalar_lea.vmem [#allocation6], %s193
          %s195 = sadd.s32 %s25, 1
          %s197 = ssub.s32 64, 64
          %198 = vsyncadd %s191, %s197
          %s199 = smul.addr %s26, 2
          %s200 = sadd.s32 %s195, %s199
          %s201 = smul.addr %s200, 64
          %s202 = scalar_lea.hbm %s1, %s201
          %s204 = sshll.u32 %s194, 4
          %s205 = int_to_ptr.vmem [resolvable:$true] %s204
          %207 = dma.hbm_to_vmem [thread:$0]  %s202, 64, %s205, %s191
        $region28: #{tpu_custom_call.1} parent=19 // pred_fallthru
          _
      $region20: #{tpu_custom_call.1} parent=5 // pred_fallthru
        _
      %p208 = scmp.le.s32.totalorder 1, %s18
      %p209 = scmp.lt.s32.totalorder %s18, 3
      %p210 = pnand %p208, %p209
      %p211 = pneg %p210
      // Predicated region
      $region29: #{tpu_custom_call.1} parent=5 // pred_check
        _
      $region30: #{tpu_custom_call.1} parent=5 // pred_check_branch
        %213 = sbr.rel (%p210) target = $region32
      $region31: #{tpu_custom_call.1} parent=5 // pred_region
        %s214 = ssub.s32 %s18, 1
        %s215 = sand.u32 %s45, 1
        %s216 = scalar_lea.sflag [#allocation4], %s215
        %s217 = sand.u32 %s45, 1
        %s218 = smul.addr %s217, 4
        %s219 = scalar_lea.vmem [#allocation3], %s218
        // Predicated region
        $region33: #{tpu_custom_call.1} parent=31 // pred_check
          %p220 = pneg %p58
        $region34: #{tpu_custom_call.1} parent=31 // pred_check_branch
          %222 = sbr.rel (%p220) target = $region36
        $region35: #{tpu_custom_call.1} parent=31 // pred_region
          %223 = dma.done %s216, 64
        $region36: #{tpu_custom_call.1} parent=31 // pred_fallthru
          _
        %s224 = sand.u32 %s23, 1
        %s225 = scalar_lea.sflag [#allocation7], %s224
        %s226 = sand.u32 %s75, 1
        %s227 = smul.addr %s226, 4
        %s228 = scalar_lea.vmem [#allocation6], %s227
        // Predicated region
        $region37: #{tpu_custom_call.1} parent=31 // pred_check
          %p229 = pneg %p88
        $region38: #{tpu_custom_call.1} parent=31 // pred_check_branch
          %231 = sbr.rel (%p229) target = $region40
        $region39: #{tpu_custom_call.1} parent=31 // pred_region
          %232 = dma.done %s225, 64
        $region40: #{tpu_custom_call.1} parent=31 // pred_fallthru
          _
        // Predicated region
        $region41: #{tpu_custom_call.1} parent=31 // pred_check
          %p233 = pneg %p109
        $region42: #{tpu_custom_call.1} parent=31 // pred_check_branch
          %235 = sbr.rel (%p233) target = $region44
        $region43: #{tpu_custom_call.1} parent=31 // pred_region
          %236 = dma.done [#allocation7], 128
        $region44: #{tpu_custom_call.1} parent=31 // pred_fallthru
          _
        %s237 = sand.u32 %s45, 1
        %s238 = scalar_lea.sflag [#allocation4], %s237
        %s239 = sand.u32 %s45, 1
        %s240 = smul.addr %s239, 4
        %s241 = scalar_lea.vmem [#allocation3], %s240
        %p242 = pneg %p58
        %p243 = pneg %p55
        %s244 = sand.u32 %s23, 1
        %s245 = scalar_lea.sflag [#allocation7], %s244
        %s246 = sand.u32 %s75, 1
        %s247 = smul.addr %s246, 4
        %s248 = scalar_lea.vmem [#allocation6], %s247
        %p249 = pneg %p88
        %p250 = pneg %p85
        %p251 = pneg %p109
        %p252 = pneg %p106
        %p253 = pneg %p137
        %p254 = pneg %p134
        %s255 = sand.u32 %s124, 1
        %s256 = scalar_lea.sflag [#allocation5], %s255
        %s257 = sand.u32 %s124, 1
        %s258 = smul.addr %s257, 8
        %s259 = scalar_lea.vmem [#allocation9], %s258
        %s260 = sadd.s32 %s27, 1
        %v261 = vld [vmem:[%s219] sm:$0xf]
        %v262 = vld [vmem:[%s228] sm:$0xf]
        %263 = vst [vmem:[#allocation2] sm:$0xf] %v261
        %266 = vrot.lane.b32.xlu0 %v261, 127
        %v267 = vpop.permute.xlu0 %266
        %268 = vrot.lane.b32.xlu0 %v262, 127
        %v269 = vpop.permute.xlu0 %268
        %vm270 = vcmask 1039360
        %v271 = vsel %vm270, %v267, %v269
        %273 = vst [vmem:[#allocation2 + $0x4] sm:$0xf] %v271
        %274 = vrot.lane.b32.xlu0 %v261, 126
        %v275 = vpop.permute.xlu0 %274
        %276 = vrot.lane.b32.xlu0 %v262, 126
        %v277 = vpop.permute.xlu0 %276
        %vm278 = vcmask 1031168
        %v279 = vsel %vm278, %v275, %v277
        %281 = vst [vmem:[#allocation2 + $0x8] sm:$0xf] %v279
        %282 = vrot.lane.b32.xlu0 %v261, 125
        %v283 = vpop.permute.xlu0 %282
        %284 = vrot.lane.b32.xlu0 %v262, 125
        %v285 = vpop.permute.xlu0 %284
        %vm286 = vcmask 1022976
        %v287 = vsel %vm286, %v283, %v285
        %289 = vst [vmem:[#allocation2 + $0xc] sm:$0xf] %v287
        %290 = vrot.lane.b32.xlu0 %v261, 124
        %v291 = vpop.permute.xlu0 %290
        %292 = vrot.lane.b32.xlu0 %v262, 124
        %v293 = vpop.permute.xlu0 %292
        %vm294 = vcmask 1014784
        %v295 = vsel %vm294, %v291, %v293
        %297 = vst [vmem:[#allocation2 + $0x10] sm:$0xf] %v295
        %v298 = vld [vmem:[#allocation8] sm:$0xff]
        %v299 = vld [vmem:[#allocation2] sm:$0xff]
        %v300 = vld [vmem:[#allocation2 + $0x8] sm:$0xff]
        %v301 = vld [vmem:[#allocation2 + $0x10] sm:$0xf]
        %vm302 = vcmask 162816
        %v304 = vsel %vm302, %v298, 0
        %vm306 = vcmask 1043456
        %v308 = vsel %vm306, %v301, 0
        %310 = vmatprep.subr.mxu0 0.0
        %311 = vmatpush1.msra.mxu0 0.0
        %312 = vmatprep.subr.mxu0 0.0
        %313 = vmatpush1.msra.mxu0 0.0
        %314 = vmatprep.subr.mxu0 0.0
        %315 = vmatpush1.msra.mxu0 0.0
        %316 = vmatprep.subr.mxu0 0.0
        %317 = vmatpush1.msra.mxu0 0.0
        %318 = vmatprep.subr.mxu0 0.0
        %319 = vmatpush1.msra.mxu0 0.0
        %320 = vmatprep.subr.mxu0 0.0
        %321 = vmatpush1.msra.mxu0 0.0
        %322 = vmatprep.subr.mxu0 0.0
        %323 = vmatpush1.msra.mxu0 0.0
        %324 = vmatprep.subr.mxu0 0.0
        %325 = vmatpush1.msra.mxu0 0.0
        %326 = vmatprep.subr.mxu0 0.0
        %327 = vmatpush1.msra.mxu0 0.0
        %328 = vmatprep.subr.mxu0 0.0
        %329 = vmatpush1.msra.mxu0 0.0
        %330 = vmatprep.subr.mxu0 0.0
        %331 = vmatpush1.msra.mxu0 0.0
        %332 = vmatprep.subr.mxu0 0.0
        %333 = vmatpush1.msra.mxu0 0.0
        %334 = vmatprep.subr.mxu0 0.0
        %335 = vmatpush1.msra.mxu0 0.0
        %336 = vmatprep.subr.mxu0 0.0
        %337 = vmatpush1.msra.mxu0 %v308
        %338 = vmatprep.subr.mxu0 0.0
        %339 = vmatpush1.msra.mxu0 %v300
        %340 = vmatprep.subr.mxu0 0.0
        %341 = vmatpush1.msra.mxu0 %v299
        %342 = vmatprep.subr.mxu0 0.0
        %343 = vmatpush2.msra.mxu0 0.0
        %344 = vmatprep.subr.mxu0 0.0
        %345 = vmatpush2.msra.mxu0 0.0
        %346 = vmatprep.subr.mxu0 0.0
        %347 = vmatpush2.msra.mxu0 0.0
        %348 = vmatprep.subr.mxu0 0.0
        %349 = vmatpush2.msra.mxu0 0.0
        %350 = vmatprep.subr.mxu0 0.0
        %351 = vmatpush2.msra.mxu0 0.0
        %352 = vmatprep.subr.mxu0 0.0
        %353 = vmatpush2.msra.mxu0 0.0
        %354 = vmatprep.subr.mxu0 0.0
        %355 = vmatpush2.msra.mxu0 0.0
        %356 = vmatprep.subr.mxu0 0.0
        %357 = vmatpush2.msra.mxu0 0.0
        %358 = vmatprep.subr.mxu0 0.0
        %359 = vmatpush2.msra.mxu0 0.0
        %360 = vmatprep.subr.mxu0 0.0
        %361 = vmatpush2.msra.mxu0 0.0
        %362 = vmatprep.subr.mxu0 0.0
        %363 = vmatpush2.msra.mxu0 0.0
        %364 = vmatprep.subr.mxu0 0.0
        %365 = vmatpush2.msra.mxu0 0.0
        %366 = vmatprep.subr.mxu0 0.0
        %367 = vmatpush2.msra.mxu0 0.0
        %368 = vmatprep.subr.mxu0 0.0
        %369 = vmatpush2.msra.mxu0 0.0
        %370 = vmatprep.subr.mxu0 0.0
        %371 = vmatpush2.msra.mxu0 0.0
        %372 = vmatprep.subr.mxu0 0.0
        %373 = vmatpush2.msra.mxu0 0.0
        %374 = vmatprep.mubr.f32.mxu0 0.0
        %375 = vmatmul.mubr.f32.gmra.mxu0 %v304
        %v376 = vpop.f32.mrf.mxu0
        %v377 = vadd.f32 0.0, %v376
        %v378 = vpop.f32.mrf.mxu0
        %379 = vdwg.mxu0
        %380 = vst [vmem:[%s259] sm:$0xff] %v377
        %s381 = sand.u32 %s124, 1
        %s382 = scalar_lea.sflag [#allocation5], %s381
        %s383 = sand.u32 %s124, 1
        %s384 = smul.addr %s383, 8
        %s385 = scalar_lea.vmem [#allocation9], %s384
        // Predicated region
        $region45: #{tpu_custom_call.1} parent=31 // pred_check
          %p386 = pneg %p134
        $region46: #{tpu_custom_call.1} parent=31 // pred_check_branch
          %388 = sbr.rel (%p386) target = $region48
        $region47: #{tpu_custom_call.1} parent=31 // pred_region
          %s390 = ssub.s32 128, 128
          %391 = vsyncadd %s382, %s390
          %s392 = sadd.s32 %s27, %s28
          %s393 = smul.addr %s392, 128
          %s394 = scalar_lea.hbm %s3, %s393
          %s396 = sshll.u32 %s385, 4
          %s397 = int_to_ptr.vmem [resolvable:$true] %s396
          %399 = dma.vmem_to_hbm [thread:$0]  %s397, 128, %s394, %s382
        $region48: #{tpu_custom_call.1} parent=31 // pred_fallthru
          _
      $region32: #{tpu_custom_call.1} parent=5 // pred_fallthru
        _
      %p400 = scmp.le.s32.totalorder 2, %s18
      // Predicated region
      $region49: #{tpu_custom_call.1} parent=5 // pred_check
        %p401 = pneg %p400
      $region50: #{tpu_custom_call.1} parent=5 // pred_check_branch
        %403 = sbr.rel (%p401) target = $region52
      $region51: #{tpu_custom_call.1} parent=5 // pred_region
        %s404 = ssub.s32 %s18, 2
        // Predicated region
        $region53: #{tpu_custom_call.1} parent=51 // pred_check
          %p405 = pneg %p140
        $region54: #{tpu_custom_call.1} parent=51 // pred_check_branch
          %407 = sbr.rel (%p405) target = $region56
        $region55: #{tpu_custom_call.1} parent=51 // pred_region
          %s408 = sand.u32 %s125, 1
          %s409 = scalar_lea.sflag [#allocation5], %s408
          %s410 = sand.u32 %s125, 1
          %s411 = smul.addr %s410, 8
          %s412 = scalar_lea.vmem [#allocation9], %s411
          %413 = dma.done %s409, 128
        $region56: #{tpu_custom_call.1} parent=51 // pred_fallthru
          _
      $region52: #{tpu_custom_call.1} parent=5 // pred_fallthru
        _
    $region6: #{tpu_custom_call.1} parent=1 // loop_footer
      %s22 = sadd.s32 1, %s18
    $region7: #{tpu_custom_call.1} parent=1 // loop_footer_branch
      %17 = sbr.rel target = $region3
    $region8: #{tpu_custom_call.1} parent=1 // loop_exit
      _
    %414 = vsyncpa [#allocation4], 1
    %s415 = scalar_lea.sflag [#allocation4], 1
    %416 = vsyncpa %s415, 1
    %417 = vsyncpa [#allocation7], 1
    %s418 = scalar_lea.sflag [#allocation7], 1
    %419 = vsyncpa %s418, 1
    %420 = vsyncpa [#allocation5], 1
    %s421 = scalar_lea.sflag [#allocation5], 1
    %422 = vsyncpa %s421, 1

</llo_original>
